<compile_context>
chip_gen: v5e
topology: v5e:2x2
jax: 0.10.0
libtpu: 0.0.40
codegen_flags: <defaults>
</compile_context>

<pallas_src>
import jax
import jax.numpy as jnp
from jax.experimental import pallas as pl
from jax.experimental.pallas import tpu as pltpu

BN_EPS = 1e-5
PAD = 128  # lane-dense feature padding (last dim multiple of 128)


# ----------------------------------------------------------------------------
# Kernel: whole classifier forward in one VMEM-resident call.
# ----------------------------------------------------------------------------
def _classifier_kernel(x_ref, w_ref, vec_ref, out_ref):
    """
    x_ref   : (B, nz)        f32  raw (unpadded) input
    w_ref   : (3, PAD, PAD)  f32  zero-padded (in, out) weights of the 3 Linears
    vec_ref : (8, PAD)       f32  rows = [gamma1, beta1, gamma2, beta2, bias3, 0, 0, 0]
    out_ref : (B, PAD)       f32  real logits land in [:, :n_out]; pad lanes are 0
    """
    batch, nz = x_ref.shape
    inv_b = 1.0 / batch  # NOTE: B must be the true batch (no sublane zero-padding)

    v = vec_ref[...]
    g1, be1 = v[0:1, :], v[1:2, :]
    g2, be2 = v[2:3, :], v[3:4, :]
    b3 = v[4:5, :]

    # Lane-pad the raw input to 128 inside VMEM (cheap concat, no HBM traffic).
    x = x_ref[...]
    if nz < PAD:
        x = jnp.concatenate([x, jnp.zeros((batch, PAD - nz), x.dtype)], axis=-1)

    def bn_relu(h, g, be):
        # Training-mode BatchNorm1d folded into one FMA.  Centered two-pass
        # variance (mean first, then E[(h-m)^2]) — robust against the
        # E[h^2]-E[h]^2 cancellation when |mean| >> std.
        # gamma/beta are zero in the padded lanes, so scale = 0 there and the
        # padded activations stay exactly 0 going into the next matmul.
        m = jnp.sum(h, axis=0, keepdims=True) * inv_b
        d = h - m
        var = jnp.sum(d * d, axis=0, keepdims=True) * inv_b
        scale = g * jax.lax.rsqrt(var + BN_EPS)
        return jnp.maximum(d * scale + be, 0.0)

    # b1 / b2 omitted on purpose: a Linear bias immediately followed by
    # training-mode BatchNorm is exactly cancelled by the mean subtraction.
    h = bn_relu(jnp.dot(x, w_ref[0], preferred_element_type=jnp.float32), g1, be1)
    h = bn_relu(jnp.dot(h, w_ref[1], preferred_element_type=jnp.float32), g2, be2)
    out_ref[...] = jnp.dot(h, w_ref[2], preferred_element_type=jnp.float32) + b3


# ----------------------------------------------------------------------------
# Host-side parameter packing (two contiguous slabs, zero-padded to 128).
# ----------------------------------------------------------------------------
def _pad2(w):
    return jnp.zeros((PAD, PAD), jnp.float32).at[:w.shape[0], :w.shape[1]].set(w)


def _pad1(vec):
    return jnp.zeros((PAD,), jnp.float32).at[:vec.shape[0]].set(vec)


def pack_params(params):
    """params = (w1, b1, g1, be1, w2, b2, g2, be2, w3, b3); weights stored (in, out).

    IMPORTANT: gamma/beta must be ZERO-padded (never one-padded): scale = 0 keeps
    the padded activation lanes at exactly 0; a one-padded gamma would multiply
    garbage by rsqrt(eps) ~ 316 and feed it into the next layer's K dimension.
    """
    (w1, _b1, g1, be1, w2, _b2, g2, be2, w3, b3) = params
    w_pack = jnp.stack([_pad2(w1), _pad2(w2), _pad2(w3)])            # (3, 128, 128)
    zero = jnp.zeros((PAD,), jnp.float32)
    vec_pack = jnp.stack([_pad1(g1), _pad1(be1), _pad1(g2), _pad1(be2),
                          _pad1(b3), zero, zero, zero])               # (8, 128)
    return w_pack, vec_pack


# ----------------------------------------------------------------------------
# Generation-aware VMEM limit (~48 MiB on v7x, ~96 MiB on v5e/v6e).
# ----------------------------------------------------------------------------
def _pick_vmem_limit():
    try:
        cap = int(pltpu.get_tpu_info().vmem_capacity_bytes)
    except Exception:  # conservative fallback if the query is unavailable
        cap = 64 * 1024 * 1024
    # Leave ~25% headroom for compiler scratch; never request above 100 MiB.
    return min(cap * 3 // 4, 100 * 1024 * 1024)


# ----------------------------------------------------------------------------
# Wrapper.  Returns the padded (B, 128) logits; consumers slice [:, :n_out]
# lazily so the kernel's store stays lane-dense and no extra HBM pass is added.
# ----------------------------------------------------------------------------
@jax.jit
def classifier_forward(x, w_pack, vec_pack, alpha=None):
    # TODO(synk): ReverseLayerF / alpha only affects the backward pass (gradient
    # reversal); the forward pass is the identity, so alpha is ignored here.
    del alpha
    batch, nz = x.shape

    cost = pl.CostEstimate(
        flops=2 * batch * PAD * PAD * 3,
        transcendentals=2 * PAD,  # rsqrt per feature, two BN layers
        bytes_accessed=(batch * (nz + PAD) + 3 * PAD * PAD + 8 * PAD) * 4,
    )

    vmem = pl.BlockSpec(memory_space=pltpu.MemorySpace.VMEM)
    return pl.pallas_call(
        _classifier_kernel,
        out_shape=jax.ShapeDtypeStruct((batch, PAD), jnp.float32),
        in_specs=[vmem, vmem, vmem],
        out_specs=vmem,
        compiler_params=pltpu.CompilerParams(vmem_limit_bytes=_pick_vmem_limit()),
        cost_estimate=cost,
    )(x.astype(jnp.float32), w_pack, vec_pack)


# ----------------------------------------------------------------------------
# Deterministic parameter construction (PyTorch-default-like init).
# Weights stored (in_features, out_features) so y = x @ W + b (== x @ W_pt.T + b).
# ----------------------------------------------------------------------------
def _init_linear(key, fan_in, fan_out):
    kw, kb = jax.random.split(key)
    bound = 1.0 / jnp.sqrt(jnp.float32(fan_in))
    w = jax.random.uniform(kw, (fan_in, fan_out), jnp.float32, -bound, bound)
    b = jax.random.uniform(kb, (fan_out,), jnp.float32, -bound, bound)
    return w, b


def _init_bn(key, n):
    kg, kb = jax.random.split(key)
    gamma = 1.0 + 0.1 * jax.random.normal(kg, (n,), jnp.float32)
    beta = 0.1 * jax.random.normal(kb, (n,), jnp.float32)
    return gamma, beta


def make_params(key, nz=50, n_out=3):
    keys = jax.random.split(key, 5)
    w1, b1 = _init_linear(keys[0], nz, 50)
    g1, be1 = _init_bn(keys[1], 50)
    w2, b2 = _init_linear(keys[2], 50, 100)
    g2, be2 = _init_bn(keys[3], 100)
    w3, b3 = _init_linear(keys[4], 100, n_out)
    return (w1, b1, g1, be1, w2, b2, g2, be2, w3, b3)


# ----------------------------------------------------------------------------
# Pure-JAX reference mirroring the PyTorch forward (with biases, textbook BN).
# ----------------------------------------------------------------------------
def reference_forward(x, params):
    (w1, b1, g1, be1, w2, b2, g2, be2, w3, b3) = params

    def bn(h, g, be):
        m = jnp.mean(h, axis=0, keepdims=True)
        v = jnp.mean((h - m) ** 2, axis=0, keepdims=True)
        return (h - m) / jnp.sqrt(v + BN_EPS) * g + be

    h = jnp.maximum(bn(x @ w1 + b1, g1, be1), 0.0)
    h = jnp.maximum(bn(h @ w2 + b2, g2, be2), 0.0)
    return h @ w3 + b3


if __name__ == "__main__":
    batch, nz, n_out = 16, 50, 3   # module defaults: nz=50, n_out=3
    # NOTE: keep batch a multiple of 8 (f32 sublane) to avoid masked sublane ops.

    key = jax.random.PRNGKey(0)
    kx, kp = jax.random.split(key)
    x = jax.random.normal(kx, (batch, nz), jnp.float32)
    params = make_params(kp, nz=nz, n_out=n_out)
    w_pack, vec_pack = pack_params(params)

    out_padded = jax.block_until_ready(classifier_forward(x, w_pack, vec_pack))
    out = out_padded[:, :n_out]

    ref = reference_forward(x, params)
    assert out.shape == (batch, n_out)
    err = float(jnp.max(jnp.abs(out - ref)))
    assert jnp.allclose(out, ref, atol=1e-4, rtol=1e-4), f"max abs err = {err}"
    # Padded output lanes must be exactly zero (zero-padded w3 columns / b3).
    assert float(jnp.max(jnp.abs(out_padded[:, n_out:]))) == 0.0

    print("KERNEL_OK")
</pallas_src>

<mosaic_0001>
module attributes {stable_mosaic.version = 11 : i64} {
  func.func @_classifier_kernel(%arg0: memref<16x50xf32, #tpu.memory_space<vmem>>, %arg1: memref<3x128x128xf32, #tpu.memory_space<vmem>>, %arg2: memref<8x128xf32, #tpu.memory_space<vmem>>, %arg3: memref<16x128xf32, #tpu.memory_space<vmem>>) attributes {dimension_semantics = [], scalar_prefetch = 0 : i64, scratch_operands = 0 : i64, tpu.core_type = #tpu.core_type<tc>} {
    %c0 = arith.constant 0 : index
    %c0_0 = arith.constant 0 : index
    %0 = vector.load %arg2[%c0, %c0_0] : memref<8x128xf32, #tpu.memory_space<vmem>>, vector<8x128xf32>
    %1 = vector.extract_strided_slice %0 {offsets = [0, 0], sizes = [1, 128], strides = [1, 1]} : vector<8x128xf32> to vector<1x128xf32>
    %2 = vector.extract_strided_slice %0 {offsets = [1, 0], sizes = [1, 128], strides = [1, 1]} : vector<8x128xf32> to vector<1x128xf32>
    %3 = vector.extract_strided_slice %0 {offsets = [2, 0], sizes = [1, 128], strides = [1, 1]} : vector<8x128xf32> to vector<1x128xf32>
    %4 = vector.extract_strided_slice %0 {offsets = [3, 0], sizes = [1, 128], strides = [1, 1]} : vector<8x128xf32> to vector<1x128xf32>
    %5 = vector.extract_strided_slice %0 {offsets = [4, 0], sizes = [1, 128], strides = [1, 1]} : vector<8x128xf32> to vector<1x128xf32>
    %c0_1 = arith.constant 0 : index
    %c0_2 = arith.constant 0 : index
    %6 = vector.load %arg0[%c0_1, %c0_2] : memref<16x50xf32, #tpu.memory_space<vmem>>, vector<16x50xf32>
    %cst = arith.constant 0.000000e+00 : f32
    %7 = vector.broadcast %cst : f32 to vector<16x78xf32>
    %8 = tpu.concatenate %6, %7 in 1 : vector<16x50xf32>, vector<16x78xf32> -> vector<16x128xf32>
    %c0_3 = arith.constant 0 : index
    %c0_4 = arith.constant 0 : index
    %c0_5 = arith.constant 0 : index
    %9 = vector.load %arg1[%c0_3, %c0_4, %c0_5] : memref<3x128x128xf32, #tpu.memory_space<vmem>>, vector<1x128x128xf32>
    %10 = vector.shape_cast %9 : vector<1x128x128xf32> to vector<128x128xf32>
    %cst_6 = arith.constant dense<0.000000e+00> : vector<16x128xf32>
    %11 = tpu.matmul %8, %10, %cst_6 {dimension_numbers = #tpu.dot_dimension_numbers<[1], [0], [0], [1], [0, 0, 1, 1], [], []>} : vector<16x128xf32>, vector<128x128xf32>, vector<16x128xf32> -> vector<16x128xf32>
    %cst_7 = arith.constant dense<0.000000e+00> : vector<128xf32>
    %12 = vector.multi_reduction <add>, %11, %cst_7 [0] : vector<16x128xf32> to vector<128xf32>
    %13 = vector.shape_cast %12 : vector<128xf32> to vector<1x128xf32>
    %cst_8 = arith.constant 6.250000e-02 : f32
    %14 = vector.broadcast %cst_8 : f32 to vector<1x128xf32>
    %15 = arith.mulf %13, %14 : vector<1x128xf32>
    %16 = vector.broadcast %15 : vector<1x128xf32> to vector<16x128xf32>
    %17 = arith.subf %11, %16 : vector<16x128xf32>
    %18 = arith.mulf %17, %17 : vector<16x128xf32>
    %cst_9 = arith.constant dense<0.000000e+00> : vector<128xf32>
    %19 = vector.multi_reduction <add>, %18, %cst_9 [0] : vector<16x128xf32> to vector<128xf32>
    %20 = vector.shape_cast %19 : vector<128xf32> to vector<1x128xf32>
    %cst_10 = arith.constant 6.250000e-02 : f32
    %21 = vector.broadcast %cst_10 : f32 to vector<1x128xf32>
    %22 = arith.mulf %20, %21 : vector<1x128xf32>
    %cst_11 = arith.constant 9.99999974E-6 : f32
    %23 = vector.broadcast %cst_11 : f32 to vector<1x128xf32>
    %24 = arith.addf %22, %23 : vector<1x128xf32>
    %25 = math.rsqrt %24 : vector<1x128xf32>
    %26 = arith.mulf %1, %25 : vector<1x128xf32>
    %27 = vector.broadcast %26 : vector<1x128xf32> to vector<16x128xf32>
    %28 = arith.mulf %17, %27 : vector<16x128xf32>
    %29 = vector.broadcast %2 : vector<1x128xf32> to vector<16x128xf32>
    %30 = arith.addf %28, %29 : vector<16x128xf32>
    %cst_12 = arith.constant 0.000000e+00 : f32
    %31 = vector.broadcast %cst_12 : f32 to vector<16x128xf32>
    %32 = arith.maximumf %30, %31 : vector<16x128xf32>
    %c1 = arith.constant 1 : index
    %c0_13 = arith.constant 0 : index
    %c0_14 = arith.constant 0 : index
    %33 = vector.load %arg1[%c1, %c0_13, %c0_14] : memref<3x128x128xf32, #tpu.memory_space<vmem>>, vector<1x128x128xf32>
    %34 = vector.shape_cast %33 : vector<1x128x128xf32> to vector<128x128xf32>
    %cst_15 = arith.constant dense<0.000000e+00> : vector<16x128xf32>
    %35 = tpu.matmul %32, %34, %cst_15 {dimension_numbers = #tpu.dot_dimension_numbers<[1], [0], [0], [1], [0, 0, 1, 1], [], []>} : vector<16x128xf32>, vector<128x128xf32>, vector<16x128xf32> -> vector<16x128xf32>
    %cst_16 = arith.constant dense<0.000000e+00> : vector<128xf32>
    %36 = vector.multi_reduction <add>, %35, %cst_16 [0] : vector<16x128xf32> to vector<128xf32>
    %37 = vector.shape_cast %36 : vector<128xf32> to vector<1x128xf32>
    %cst_17 = arith.constant 6.250000e-02 : f32
    %38 = vector.broadcast %cst_17 : f32 to vector<1x128xf32>
    %39 = arith.mulf %37, %38 : vector<1x128xf32>
    %40 = vector.broadcast %39 : vector<1x128xf32> to vector<16x128xf32>
    %41 = arith.subf %35, %40 : vector<16x128xf32>
    %42 = arith.mulf %41, %41 : vector<16x128xf32>
    %cst_18 = arith.constant dense<0.000000e+00> : vector<128xf32>
    %43 = vector.multi_reduction <add>, %42, %cst_18 [0] : vector<16x128xf32> to vector<128xf32>
    %44 = vector.shape_cast %43 : vector<128xf32> to vector<1x128xf32>
    %cst_19 = arith.constant 6.250000e-02 : f32
    %45 = vector.broadcast %cst_19 : f32 to vector<1x128xf32>
    %46 = arith.mulf %44, %45 : vector<1x128xf32>
    %cst_20 = arith.constant 9.99999974E-6 : f32
    %47 = vector.broadcast %cst_20 : f32 to vector<1x128xf32>
    %48 = arith.addf %46, %47 : vector<1x128xf32>
    %49 = math.rsqrt %48 : vector<1x128xf32>
    %50 = arith.mulf %3, %49 : vector<1x128xf32>
    %51 = vector.broadcast %50 : vector<1x128xf32> to vector<16x128xf32>
    %52 = arith.mulf %41, %51 : vector<16x128xf32>
    %53 = vector.broadcast %4 : vector<1x128xf32> to vector<16x128xf32>
    %54 = arith.addf %52, %53 : vector<16x128xf32>
    %cst_21 = arith.constant 0.000000e+00 : f32
    %55 = vector.broadcast %cst_21 : f32 to vector<16x128xf32>
    %56 = arith.maximumf %54, %55 : vector<16x128xf32>
    %c2 = arith.constant 2 : index
    %c0_22 = arith.constant 0 : index
    %c0_23 = arith.constant 0 : index
    %57 = vector.load %arg1[%c2, %c0_22, %c0_23] : memref<3x128x128xf32, #tpu.memory_space<vmem>>, vector<1x128x128xf32>
    %58 = vector.shape_cast %57 : vector<1x128x128xf32> to vector<128x128xf32>
    %cst_24 = arith.constant dense<0.000000e+00> : vector<16x128xf32>
    %59 = tpu.matmul %56, %58, %cst_24 {dimension_numbers = #tpu.dot_dimension_numbers<[1], [0], [0], [1], [0, 0, 1, 1], [], []>} : vector<16x128xf32>, vector<128x128xf32>, vector<16x128xf32> -> vector<16x128xf32>
    %60 = vector.broadcast %5 : vector<1x128xf32> to vector<16x128xf32>
    %61 = arith.addf %59, %60 : vector<16x128xf32>
    %c0_25 = arith.constant 0 : index
    %c0_26 = arith.constant 0 : index
    %62 = vector.load %arg3[%c0_25, %c0_26] : memref<16x128xf32, #tpu.memory_space<vmem>>, vector<16x128xf32>
    tpu.vector_store %arg3[%c0_25, %c0_26], %61 {strides = array<i32>} : memref<16x128xf32, #tpu.memory_space<vmem>>, vector<16x128xf32>,
    return
  }
}

</mosaic_0001>

<llo_original>
// kernel: classifier_forward.1
$region0: #{classifier_forward.1}
  #allocation0 [shape = 'u32[]', space=smem, size = 0x4, offset = 0x4, fixed_abs, tag = 'smem constant byte address 0x4 - core index']
  #allocation1 [shape = 'u32[72,128]{1,0:T(1,128)}', space=vmem, size = 0x9000, scoped, tag = 'internal scratch']
  %s0 = inlined_call_operand.hbm [shape: f32[16,50], index: 0, kind: input, shape index: {}]
  %s1 = inlined_call_operand.hbm [shape: f32[3,128,128], index: 1, kind: input, shape index: {}]
  %s2 = inlined_call_operand.hbm [shape: f32[8,128], index: 2, kind: input, shape index: {}]
  %s3 = inlined_call_operand.hbm [shape: f32[16,128], index: 3, kind: output, shape index: {}]
  %s4 = sld [smem:[#allocation0]]
  $region34: #{classifier_forward.1} parent=0
    _
  %s6 = ssub.s32 1, %s4
  %s7 = scalar_select 0, %s6, %s4
  $region1: #{classifier_forward.1} parent=0
    #allocation2 [shape = 'u8[8192]{0}', space=vmem, size = 0x2000, scoped, tag = 'input window, operand 0, single buffered']
    #allocation3 [shape = 's32[1]{0}', space=sflag, size = 0x4, scoped, tag = 'scoped memory for classifier_forward.1']
    #allocation4 [shape = 's32[1]{0}', space=sflag, size = 0x4, scoped, tag = 'scoped memory for classifier_forward.1']
    #allocation5 [shape = 'u8[196608]{0}', space=vmem, size = 0x30000, scoped, tag = 'input window, operand 1, single buffered']
    #allocation6 [shape = 's32[1]{0}', space=sflag, size = 0x4, scoped, tag = 'scoped memory for classifier_forward.1']
    #allocation7 [shape = 'u8[4096]{0}', space=vmem, size = 0x1000, scoped, tag = 'input window, operand 2, single buffered']
    #allocation8 [shape = 'u8[8192]{0}', space=vmem, size = 0x2000, scoped, tag = 'output window, operand 0, single buffered']
    %8 = vsyncpa [#allocation3], 0
    %9 = vsyncpa [#allocation6], 0
    %10 = vsyncpa [#allocation4], 0
    // Predicated region
    $region2: #{classifier_forward.1} parent=1 // pred_check
      _
    $region3: #{classifier_forward.1} parent=1 // pred_check_branch
      %12 = sbr.rel (0) target = $region5
    $region4: #{classifier_forward.1} parent=1 // pred_region
      %14 = vsyncadd [#allocation3], 0
      %s15 = sshll.u32 %s0, 4
      %s16 = int_to_ptr.hbm [resolvable:$true] %s15
      %s17 = sshll.u32 [#allocation2], 4
      %s18 = int_to_ptr.vmem [resolvable:$true] %s17
      %23 = dma.hbm_to_vmem [thread:$0]  %s16, 256, %s18, [#allocation3], 128, 128, 8
    $region5: #{classifier_forward.1} parent=1 // pred_fallthru
      _
    // Predicated region
    $region6: #{classifier_forward.1} parent=1 // pred_check
      _
    $region7: #{classifier_forward.1} parent=1 // pred_check_branch
      %25 = sbr.rel (0) target = $region9
    $region8: #{classifier_forward.1} parent=1 // pred_region
      %27 = vsyncadd [#allocation6], 0
      %s28 = sshll.u32 %s1, 4
      %s29 = int_to_ptr.hbm [resolvable:$true] %s28
      %s30 = sshll.u32 [#allocation5], 4
      %s31 = int_to_ptr.vmem [resolvable:$true] %s30
      %36 = dma.hbm_to_vmem [thread:$0]  %s29, 6144, %s31, [#allocation6], 128, 128, 8
    $region9: #{classifier_forward.1} parent=1 // pred_fallthru
      _
    // Predicated region
    $region10: #{classifier_forward.1} parent=1 // pred_check
      _
    $region11: #{classifier_forward.1} parent=1 // pred_check_branch
      %38 = sbr.rel (0) target = $region13
    $region12: #{classifier_forward.1} parent=1 // pred_region
      %40 = vsyncadd [#allocation6], 0
      %s42 = sshll.u32 %s2, 4
      %s43 = int_to_ptr.hbm [resolvable:$true] %s42
      %s44 = sshll.u32 [#allocation7], 4
      %s45 = int_to_ptr.vmem [resolvable:$true] %s44
      %47 = dma.hbm_to_vmem [thread:$0]  %s43, 128, %s45, [#allocation6]
    $region13: #{classifier_forward.1} parent=1 // pred_fallthru
      _
    // Predicated region
    $region14: #{classifier_forward.1} parent=1 // pred_check
      _
    $region15: #{classifier_forward.1} parent=1 // pred_check_branch
      %49 = sbr.rel (0) target = $region17
    $region16: #{classifier_forward.1} parent=1 // pred_region
      %51 = dma.done [#allocation3], 256
    $region17: #{classifier_forward.1} parent=1 // pred_fallthru
      _
    // Predicated region
    $region18: #{classifier_forward.1} parent=1 // pred_check
      _
    $region19: #{classifier_forward.1} parent=1 // pred_check_branch
      %53 = sbr.rel (0) target = $region21
    $region20: #{classifier_forward.1} parent=1 // pred_region
      %55 = dma.done [#allocation6], 6144
    $region21: #{classifier_forward.1} parent=1 // pred_fallthru
      _
    // Predicated region
    $region22: #{classifier_forward.1} parent=1 // pred_check
      _
    $region23: #{classifier_forward.1} parent=1 // pred_check_branch
      %57 = sbr.rel (0) target = $region25
    $region24: #{classifier_forward.1} parent=1 // pred_region
      %59 = dma.done [#allocation6], 128
    $region25: #{classifier_forward.1} parent=1 // pred_fallthru
      _
    %v60 = vld [vmem:[#allocation7] sm:$0xff]
    %v61 = vld [vmem:[#allocation2] sm:$0xff]
    %v62 = vld [vmem:[#allocation2 + $0x8] sm:$0xff]
    %vm63 = vcmask 408576
    %v64 = vsel %vm63, %v61, 0.0
    %v65 = vsel %vm63, %v62, 0.0
    %v66 = vld [vmem:[#allocation5] sm:$0xff]
    %v67 = vld [vmem:[#allocation5 + $0x8] sm:$0xff]
    %v68 = vld [vmem:[#allocation5 + $0x10] sm:$0xff]
    %v69 = vld [vmem:[#allocation5 + $0x18] sm:$0xff]
    %v70 = vld [vmem:[#allocation5 + $0x20] sm:$0xff]
    %v71 = vld [vmem:[#allocation5 + $0x28] sm:$0xff]
    %v72 = vld [vmem:[#allocation5 + $0x30] sm:$0xff]
    %v73 = vld [vmem:[#allocation5 + $0x38] sm:$0xff]
    %v74 = vld [vmem:[#allocation5 + $0x40] sm:$0xff]
    %v75 = vld [vmem:[#allocation5 + $0x48] sm:$0xff]
    %v76 = vld [vmem:[#allocation5 + $0x50] sm:$0xff]
    %v77 = vld [vmem:[#allocation5 + $0x58] sm:$0xff]
    %v78 = vld [vmem:[#allocation5 + $0x60] sm:$0xff]
    %v79 = vld [vmem:[#allocation5 + $0x68] sm:$0xff]
    %v80 = vld [vmem:[#allocation5 + $0x70] sm:$0xff]
    %v81 = vld [vmem:[#allocation5 + $0x78] sm:$0xff]
    %82 = vmatpush.msra.mxu0 %v81
    %83 = vmatpush.msra.mxu0 %v80
    %84 = vmatpush.msra.mxu0 %v79
    %85 = vmatpush.msra.mxu0 %v78
    %86 = vmatpush.msra.mxu0 %v77
    %87 = vmatpush.msra.mxu0 %v76
    %88 = vmatpush.msra.mxu0 %v75
    %89 = vmatpush.msra.mxu0 %v74
    %90 = vmatpush.msra.mxu0 %v73
    %91 = vmatpush.msra.mxu0 %v72
    %92 = vmatpush.msra.mxu0 %v71
    %93 = vmatpush.msra.mxu0 %v70
    %94 = vmatpush.msra.mxu0 %v69
    %95 = vmatpush.msra.mxu0 %v68
    %96 = vmatpush.msra.mxu0 %v67
    %97 = vmatpush.msra.mxu0 %v66
    %98 = vmatmul.f32.gmra.mxu0 %v64
    %v99 = vpop.f32.mrf.mxu0
    %v100 = vadd.f32 0.0, %v99
    %101 = vmatmul.f32.gmra.mxu0 %v65
    %v102 = vpop.f32.mrf.mxu0
    %v103 = vadd.f32 0.0, %v102
    %104 = vdwg.mxu0
    %v105 = vadd.f32 %v100, %v103
    %v106 = vrot.slane %v105, 4
    %v107 = vadd.f32 %v105, %v106
    %v108 = vrot.slane %v107, 2
    %v109 = vadd.f32 %v107, %v108
    %v110 = vrot.slane %v109, 1
    %v111 = vadd.f32 %v109, %v110
    %v112 = vmul.f32 %v111, 0.0625
    %v113 = vsub.f32 %v100, %v112
    %v114 = vsub.f32 %v103, %v112
    %v115 = vmul.f32 %v113, %v113
    %v116 = vmul.f32 %v114, %v114
    %v117 = vadd.f32 %v115, %v116
    %v118 = vrot.slane %v117, 4
    %v119 = vadd.f32 %v117, %v118
    %v120 = vrot.slane %v119, 2
    %v121 = vadd.f32 %v119, %v120
    %v122 = vrot.slane %v121, 1
    %v123 = vadd.f32 %v121, %v122
    %v124 = vmul.f32 %v123, 0.0625
    %v125 = vadd.f32 %v124, 1e-05
    %v126 = vrsqrt.pop %v125
    %v127 = vmul.f32 %v126, %v125
    %v128 = vmul.f32 %v127, %v126
    %v129 = vmul.f32 0.5, %v128
    %v130 = vsub.f32 1.5, %v129
    %v131 = vmul.f32 %v126, %v130
    %vm132 = vweird.f32 %v125
    %vm133 = vweird.f32 %v126
    %vm134 = vmor %vm132, %vm133
    %v135 = vsel %vm134, %v126, %v131
    %v136 = vmul.f32 %v60, %v135
    %v137 = vperm.slane %v136, 0
    %v138 = vmul.f32 %v113, %v137
    %v139 = vmul.f32 %v114, %v137
    %v140 = vperm.slane %v60, 1
    %v141 = vadd.f32 %v138, %v140
    %v142 = vadd.f32 %v139, %v140
    %v143 = vmax.f32 %v141, 0.0
    %v144 = vmax.f32 %v142, 0.0
    %s145 = scalar_lea.vmem [#allocation5], 128
    %v146 = vld [vmem:[%s145] sm:$0xff]
    %v147 = vld [vmem:[%s145 + $0x8] sm:$0xff]
    %v148 = vld [vmem:[%s145 + $0x10] sm:$0xff]
    %v149 = vld [vmem:[%s145 + $0x18] sm:$0xff]
    %v150 = vld [vmem:[%s145 + $0x20] sm:$0xff]
    %v151 = vld [vmem:[%s145 + $0x28] sm:$0xff]
    %v152 = vld [vmem:[%s145 + $0x30] sm:$0xff]
    %v153 = vld [vmem:[%s145 + $0x38] sm:$0xff]
    %v154 = vld [vmem:[%s145 + $0x40] sm:$0xff]
    %v155 = vld [vmem:[%s145 + $0x48] sm:$0xff]
    %v156 = vld [vmem:[%s145 + $0x50] sm:$0xff]
    %v157 = vld [vmem:[%s145 + $0x58] sm:$0xff]
    %v158 = vld [vmem:[%s145 + $0x60] sm:$0xff]
    %v159 = vld [vmem:[%s145 + $0x68] sm:$0xff]
    %v160 = vld [vmem:[%s145 + $0x70] sm:$0xff]
    %v161 = vld [vmem:[%s145 + $0x78] sm:$0xff]
    %162 = vmatpush.msra.mxu0 %v161
    %163 = vmatpush.msra.mxu0 %v160
    %164 = vmatpush.msra.mxu0 %v159
    %165 = vmatpush.msra.mxu0 %v158
    %166 = vmatpush.msra.mxu0 %v157
    %167 = vmatpush.msra.mxu0 %v156
    %168 = vmatpush.msra.mxu0 %v155
    %169 = vmatpush.msra.mxu0 %v154
    %170 = vmatpush.msra.mxu0 %v153
    %171 = vmatpush.msra.mxu0 %v152
    %172 = vmatpush.msra.mxu0 %v151
    %173 = vmatpush.msra.mxu0 %v150
    %174 = vmatpush.msra.mxu0 %v149
    %175 = vmatpush.msra.mxu0 %v148
    %176 = vmatpush.msra.mxu0 %v147
    %177 = vmatpush.msra.mxu0 %v146
    %178 = vmatmul.f32.gmra.mxu0 %v143
    %v179 = vpop.f32.mrf.mxu0
    %v180 = vadd.f32 0.0, %v179
    %181 = vmatmul.f32.gmra.mxu0 %v144
    %v182 = vpop.f32.mrf.mxu0
    %v183 = vadd.f32 0.0, %v182
    %184 = vdwg.mxu0
    %v185 = vadd.f32 %v180, %v183
    %v186 = vrot.slane %v185, 4
    %v187 = vadd.f32 %v185, %v186
    %v188 = vrot.slane %v187, 2
    %v189 = vadd.f32 %v187, %v188
    %v190 = vrot.slane %v189, 1
    %v191 = vadd.f32 %v189, %v190
    %v192 = vmul.f32 %v191, 0.0625
    %v193 = vsub.f32 %v180, %v192
    %v194 = vsub.f32 %v183, %v192
    %v195 = vmul.f32 %v193, %v193
    %v196 = vmul.f32 %v194, %v194
    %v197 = vadd.f32 %v195, %v196
    %v198 = vrot.slane %v197, 4
    %v199 = vadd.f32 %v197, %v198
    %v200 = vrot.slane %v199, 2
    %v201 = vadd.f32 %v199, %v200
    %v202 = vrot.slane %v201, 1
    %v203 = vadd.f32 %v201, %v202
    %v204 = vmul.f32 %v203, 0.0625
    %v205 = vadd.f32 %v204, 1e-05
    %v206 = vrsqrt.pop %v205
    %v207 = vmul.f32 %v206, %v205
    %v208 = vmul.f32 %v207, %v206
    %v209 = vmul.f32 0.5, %v208
    %v210 = vsub.f32 1.5, %v209
    %v211 = vmul.f32 %v206, %v210
    %vm212 = vweird.f32 %v205
    %vm213 = vweird.f32 %v206
    %vm214 = vmor %vm212, %vm213
    %v215 = vsel %vm214, %v206, %v211
    %v216 = vmul.f32 %v60, %v215
    %v217 = vperm.slane %v216, 2
    %v218 = vmul.f32 %v193, %v217
    %v219 = vmul.f32 %v194, %v217
    %v220 = vperm.slane %v60, 3
    %v221 = vadd.f32 %v218, %v220
    %v222 = vadd.f32 %v219, %v220
    %v223 = vmax.f32 %v221, 0.0
    %v224 = vmax.f32 %v222, 0.0
    %s225 = scalar_lea.vmem [#allocation5], 256
    %v226 = vld [vmem:[%s225] sm:$0xff]
    %v227 = vld [vmem:[%s225 + $0x8] sm:$0xff]
    %v228 = vld [vmem:[%s225 + $0x10] sm:$0xff]
    %v229 = vld [vmem:[%s225 + $0x18] sm:$0xff]
    %v230 = vld [vmem:[%s225 + $0x20] sm:$0xff]
    %v231 = vld [vmem:[%s225 + $0x28] sm:$0xff]
    %v232 = vld [vmem:[%s225 + $0x30] sm:$0xff]
    %v233 = vld [vmem:[%s225 + $0x38] sm:$0xff]
    %v234 = vld [vmem:[%s225 + $0x40] sm:$0xff]
    %v235 = vld [vmem:[%s225 + $0x48] sm:$0xff]
    %v236 = vld [vmem:[%s225 + $0x50] sm:$0xff]
    %v237 = vld [vmem:[%s225 + $0x58] sm:$0xff]
    %v238 = vld [vmem:[%s225 + $0x60] sm:$0xff]
    %v239 = vld [vmem:[%s225 + $0x68] sm:$0xff]
    %v240 = vld [vmem:[%s225 + $0x70] sm:$0xff]
    %v241 = vld [vmem:[%s225 + $0x78] sm:$0xff]
    %v242 = vperm.slane %v60, 4
    %243 = vmatpush.msra.mxu0 %v241
    %244 = vmatpush.msra.mxu0 %v240
    %245 = vmatpush.msra.mxu0 %v239
    %246 = vmatpush.msra.mxu0 %v238
    %247 = vmatpush.msra.mxu0 %v237
    %248 = vmatpush.msra.mxu0 %v236
    %249 = vmatpush.msra.mxu0 %v235
    %250 = vmatpush.msra.mxu0 %v234
    %251 = vmatpush.msra.mxu0 %v233
    %252 = vmatpush.msra.mxu0 %v232
    %253 = vmatpush.msra.mxu0 %v231
    %254 = vmatpush.msra.mxu0 %v230
    %255 = vmatpush.msra.mxu0 %v229
    %256 = vmatpush.msra.mxu0 %v228
    %257 = vmatpush.msra.mxu0 %v227
    %258 = vmatpush.msra.mxu0 %v226
    %259 = vmatmul.f32.gmra.mxu0 %v223
    %v260 = vpop.f32.mrf.mxu0
    %v261 = vadd.f32 %v242, %v260
    %262 = vmatmul.f32.gmra.mxu0 %v224
    %v263 = vpop.f32.mrf.mxu0
    %v264 = vadd.f32 %v242, %v263
    %265 = vdwg.mxu0
    %266 = vst [vmem:[#allocation8] sm:$0xff] %v261
    %267 = vst [vmem:[#allocation8 + $0x8] sm:$0xff] %v264
    // Predicated region
    $region26: #{classifier_forward.1} parent=1 // pred_check
      _
    $region27: #{classifier_forward.1} parent=1 // pred_check_branch
      %269 = sbr.rel (0) target = $region29
    $region28: #{classifier_forward.1} parent=1 // pred_region
      %271 = vsyncadd [#allocation4], 0
      %s272 = sshll.u32 [#allocation8], 4
      %s273 = int_to_ptr.vmem [resolvable:$true] %s272
      %s274 = sshll.u32 %s3, 4
      %s275 = int_to_ptr.hbm [resolvable:$true] %s274
      %280 = dma.vmem_to_hbm [thread:$0]  %s273, 256, %s275, [#allocation4], 128, 128, 8
    $region29: #{classifier_forward.1} parent=1 // pred_fallthru
      _
    // Predicated region
    $region30: #{classifier_forward.1} parent=1 // pred_check
      _
    $region31: #{classifier_forward.1} parent=1 // pred_check_branch
      %282 = sbr.rel (0) target = $region33
    $region32: #{classifier_forward.1} parent=1 // pred_region
      %284 = dma.done [#allocation4], 256
    $region33: #{classifier_forward.1} parent=1 // pred_fallthru
      _
    %285 = vsyncpa [#allocation3], 1
    %286 = vsyncpa [#allocation6], 1
    %287 = vsyncpa [#allocation4], 1

</llo_original>
